<compile_context>
chip_gen: v6e
topology: v6e:2x2x1
jax: 0.10.0
libtpu: 0.0.40
codegen_flags: <defaults>
</compile_context>

<pallas_src>
import math

import jax
import jax.numpy as jnp
from jax.experimental import pallas as pl
from jax.experimental.pallas import tpu as pltpu

LOG_2PI = math.log(2.0 * math.pi)


# ---------------------------------------------------------------------------
# ConvPc structure (mirrors ConvPc.__init__ for structure='top-down',
# order='sum-prod')
# ---------------------------------------------------------------------------
def build_layers(channels, H, W):
    layers = [("sum", channels[-1], 1, 1, 1)]                    # (kind, ic, oc, h, w)
    h, w = 1, 1
    ch_ext = [channels[0]] + list(channels)
    for i in reversed(range(len(channels))):
        h, w = h * 2, w * 2
        layers.append(("sumprod", ch_ext[i], ch_ext[i + 1], h, w, 2, 2))
    layers.append(("prod", H // h, W // w))                      # (kind, kh, kw)
    return list(reversed(layers))                                # forward order


# ---------------------------------------------------------------------------
# Fused Pallas kernel
# ---------------------------------------------------------------------------
def _is_pow2(v):
    return v > 0 and (v & (v - 1)) == 0


def _pool_matrix(H, W, kh, kw):
    """(HW, HWo) 0/1 selector for non-overlapping kh x kw sum pooling of a
    row-major flattened (H, W) image.  Built in-kernel from iota + shift/mask
    (all sizes are powers of two for this config), so it costs no DMA."""
    Ho, Wo = H // kh, W // kw
    HW, HWo = H * W, Ho * Wo
    assert all(_is_pow2(v) for v in (W, Wo, kh, kw)), (
        "in-kernel pool-matrix generation assumes power-of-two sizes")
    s_w, s_wo, s_kh, s_kw = (int(math.log2(v)) for v in (W, Wo, kh, kw))
    i = jax.lax.broadcasted_iota(jnp.int32, (HW, HWo), 0)   # flat input index
    j = jax.lax.broadcasted_iota(jnp.int32, (HW, HWo), 1)   # flat output index
    h, w = i >> s_w, i & (W - 1)
    ho, wo = j >> s_wo, j & (Wo - 1)
    keep = ((h >> s_kh) == ho) & ((w >> s_kw) == wo)
    return keep.astype(jnp.float32)


def _make_fused_kernel(layer_descs, H, W, num_sum):
    """Builds the fused kernel: leaf -> [SumLayer | ProdConv]* -> scalar."""

    def kernel(x_ref, mu_ref, ls_ref, *rest):
        lw_refs, out_ref = rest[:num_sum], rest[num_sum]

        # --- Gaussian leaf log-likelihoods, summed over data channels -------
        x = x_ref[...]                        # (1, C, HW)  one sample
        mu = mu_ref[...]                      # (L, C, HW)
        ls = ls_ref[...]                      # (L, C, HW)
        z = (x - mu) * jnp.exp(-ls)
        ll = -0.5 * z * z - ls - 0.5 * LOG_2PI
        y = jnp.sum(ll, axis=1)               # (L, HW)  channels on sublanes

        cur_h, cur_w = H, W
        si = 0
        for desc in layer_descs:
            kind = desc[0]
            if kind in ("sum", "sumprod"):    # SumLayer (order 'sum-prod')
                lw = lw_refs[si][...]         # (OC, IC, hw) log_softmax'ed weights
                si += 1
                s = y[None, :, :] + lw        # (OC, IC, hw)
                m = jnp.max(s, axis=1, keepdims=True)
                y = jnp.log(jnp.sum(jnp.exp(s - m), axis=1)) + m[:, 0, :]   # (OC, hw)
            if kind in ("prod", "sumprod"):   # ProdConv: kh x kw sum pooling
                kh, kw = (desc[1], desc[2]) if kind == "prod" else (desc[5], desc[6])
                ho, wo = cur_h // kh, cur_w // kw
                if ho * wo == 1:
                    y = jnp.sum(y, axis=1, keepdims=True)                   # (C, 1)
                else:
                    p = _pool_matrix(cur_h, cur_w, kh, kw)                  # (hw, hwo)
                    y = jnp.dot(y, p, preferred_element_type=jnp.float32)   # (C, hwo)
                cur_h, cur_w = ho, wo

        out_ref[...] = y[None]                # final y is (1, 1)

    return kernel


def conv_pc_forward(x, leaf_mu, leaf_logstd, layer_descs, sum_logits):
    N, C, H, W = x.shape
    L = leaf_mu.shape[0]
    HW = H * W
    x_flat = x.reshape(N, C, HW)

    # Weight-only work hoisted out of the per-sample kernel path.
    log_weights = [jax.nn.log_softmax(lg, axis=1) for lg in sum_logits]

    in_specs = [
        pl.BlockSpec((1, C, HW), lambda n: (n, 0, 0)),      # one sample per step
        pl.BlockSpec((L, C, HW), lambda n: (0, 0, 0)),      # leaf means (DMA once)
        pl.BlockSpec((L, C, HW), lambda n: (0, 0, 0)),      # leaf log-stds
    ]
    for lw in log_weights:
        in_specs.append(pl.BlockSpec(tuple(lw.shape), lambda n: (0, 0, 0)))

    kernel = _make_fused_kernel(layer_descs, H, W, len(log_weights))
    out = pl.pallas_call(
        kernel,
        out_shape=jax.ShapeDtypeStruct((N, 1, 1), jnp.float32),
        grid=(N,),
        in_specs=in_specs,
        out_specs=pl.BlockSpec((1, 1, 1), lambda n: (n, 0, 0)),
        compiler_params=pltpu.CompilerParams(dimension_semantics=("parallel",)),
    )(x_flat, leaf_mu, leaf_logstd, *log_weights)
    return out.reshape(N)                    # x.view(x.size(0))


# ---------------------------------------------------------------------------
# Pure-JAX reference (same math, no Pallas) for a correctness check
# ---------------------------------------------------------------------------
def conv_pc_reference(x, leaf_mu, leaf_logstd, layer_descs, sum_logits):
    N, C, H, W = x.shape
    xf = x.reshape(N, C, H * W)
    z = (xf[:, None] - leaf_mu[None]) * jnp.exp(-leaf_logstd[None])
    ll = -0.5 * z * z - leaf_logstd[None] - 0.5 * LOG_2PI        # (N, L, C, HW)
    y = ll.sum(axis=2)                                           # (N, L, HW)
    cur_c, cur_h, cur_w = leaf_mu.shape[0], H, W
    si = 0
    for desc in layer_descs:
        kind = desc[0]
        if kind in ("sum", "sumprod"):
            logits = sum_logits[si]
            si += 1
            lw = jax.nn.log_softmax(logits, axis=1)              # (OC, IC, HW)
            y = jax.scipy.special.logsumexp(y[:, None] + lw[None], axis=2)
            cur_c = desc[2]
        if kind in ("prod", "sumprod"):
            kh, kw = (desc[1], desc[2]) if kind == "prod" else (desc[5], desc[6])
            y = y.reshape(N, cur_c, cur_h // kh, kh, cur_w // kw, kw).sum(axis=(3, 5))
            cur_h //= kh
            cur_w //= kw
            y = y.reshape(N, cur_c, cur_h * cur_w)
    return y.reshape(N)


# ---------------------------------------------------------------------------
if __name__ == "__main__":
    key = jax.random.PRNGKey(0)
    N, C_DATA, H, W = 2, 1, 16, 16          # batch, data channels, height, width
    CHANNELS = [4, 8]                       # ConvPcConfig.channels (channels[0] = leaves)

    layer_descs = build_layers(CHANNELS, H, W)

    k_mu, k_ls, k_sum, k_x = jax.random.split(key, 4)

    # Synthetic Gaussian leaf (leaf_type is injected in the original module).
    L = CHANNELS[0]
    leaf_mu = jax.random.normal(k_mu, (L, C_DATA, H * W), jnp.float32)
    leaf_logstd = 0.1 * jax.random.normal(k_ls, (L, C_DATA, H * W), jnp.float32)

    # SumLayer logits = log(rand(oc, ic, h, w)), stored flattened as (oc, ic, h*w).
    sum_logits = []
    sk = k_sum
    for desc in layer_descs:
        if desc[0] in ("sum", "sumprod"):
            _, ic, oc, h, w = desc[:5]
            sk, sub = jax.random.split(sk)
            u = jax.random.uniform(sub, (oc, ic, h * w), jnp.float32,
                                   minval=1e-3, maxval=1.0)
            sum_logits.append(jnp.log(u))

    x = jax.random.normal(k_x, (N, C_DATA, H, W), jnp.float32)

    out = conv_pc_forward(x, leaf_mu, leaf_logstd, layer_descs, sum_logits)
    out = jax.block_until_ready(out)

    ref = conv_pc_reference(x, leaf_mu, leaf_logstd, layer_descs, sum_logits)
    assert out.shape == (N,)
    assert jnp.allclose(out, ref, atol=1e-3, rtol=1e-3), (out, ref)

    # TODO(synk): sample() / input-cache paths (sampling_context) are inference-time
    # sampling utilities, not part of the forward pass, and are not implemented.
    print("KERNEL_OK")
</pallas_src>

<mosaic_0001>
module attributes {stable_mosaic.version = 11 : i64} {
  func.func @kernel(%arg0: i32, %arg1: memref<1x1x256xf32, #tpu.memory_space<vmem>>, %arg2: memref<4x1x256xf32, #tpu.memory_space<vmem>>, %arg3: memref<4x1x256xf32, #tpu.memory_space<vmem>>, %arg4: memref<4x4x16xf32, #tpu.memory_space<vmem>>, %arg5: memref<8x4x4xf32, #tpu.memory_space<vmem>>, %arg6: memref<1x8x1xf32, #tpu.memory_space<vmem>>, %arg7: memref<1x1x1xf32, #tpu.memory_space<vmem>>) attributes {dimension_semantics = [#tpu.dimension_semantics<parallel>], iteration_bounds = array<i64: 2>, scalar_prefetch = 0 : i64, scratch_operands = 0 : i64, tpu.core_type = #tpu.core_type<tc>, window_params = [{transform_indices = @transform_0, window_bounds = array<i64: 1, 1, 256>}, {pipeline_mode = #tpu.pipeline_mode<synchronous>, transform_indices = @transform_1, window_bounds = array<i64: 4, 1, 256>}, {pipeline_mode = #tpu.pipeline_mode<synchronous>, transform_indices = @transform_2, window_bounds = array<i64: 4, 1, 256>}, {pipeline_mode = #tpu.pipeline_mode<synchronous>, transform_indices = @transform_3, window_bounds = array<i64: 4, 4, 16>}, {pipeline_mode = #tpu.pipeline_mode<synchronous>, transform_indices = @transform_4, window_bounds = array<i64: 8, 4, 4>}, {pipeline_mode = #tpu.pipeline_mode<synchronous>, transform_indices = @transform_5, window_bounds = array<i64: 1, 8, 1>}, {transform_indices = @transform_6, window_bounds = array<i64: 1, 1, 1>}]} {
    %c0 = arith.constant 0 : index
    %c0_0 = arith.constant 0 : index
    %c0_1 = arith.constant 0 : index
    %0 = vector.load %arg1[%c0, %c0_0, %c0_1] : memref<1x1x256xf32, #tpu.memory_space<vmem>>, vector<1x1x256xf32>
    %c0_2 = arith.constant 0 : index
    %c0_3 = arith.constant 0 : index
    %c0_4 = arith.constant 0 : index
    %1 = vector.load %arg2[%c0_2, %c0_3, %c0_4] : memref<4x1x256xf32, #tpu.memory_space<vmem>>, vector<4x1x256xf32>
    %c0_5 = arith.constant 0 : index
    %c0_6 = arith.constant 0 : index
    %c0_7 = arith.constant 0 : index
    %2 = vector.load %arg3[%c0_5, %c0_6, %c0_7] : memref<4x1x256xf32, #tpu.memory_space<vmem>>, vector<4x1x256xf32>
    %3 = vector.broadcast %0 : vector<1x1x256xf32> to vector<4x1x256xf32>
    %4 = arith.subf %3, %1 : vector<4x1x256xf32>
    %cst = arith.constant 0.000000e+00 : f32
    %5 = vector.broadcast %cst : f32 to vector<4x1x256xf32>
    %6 = arith.subf %5, %2 : vector<4x1x256xf32>
    %7 = math.exp %6 : vector<4x1x256xf32>
    %8 = arith.mulf %4, %7 : vector<4x1x256xf32>
    %cst_8 = arith.constant -5.000000e-01 : f32
    %9 = vector.broadcast %cst_8 : f32 to vector<4x1x256xf32>
    %10 = arith.mulf %9, %8 : vector<4x1x256xf32>
    %11 = arith.mulf %10, %8 : vector<4x1x256xf32>
    %12 = arith.subf %11, %2 : vector<4x1x256xf32>
    %cst_9 = arith.constant 0.918938517 : f32
    %13 = vector.broadcast %cst_9 : f32 to vector<4x1x256xf32>
    %14 = arith.subf %12, %13 : vector<4x1x256xf32>
    %cst_10 = arith.constant dense<0.000000e+00> : vector<4x256xf32>
    %15 = vector.multi_reduction <add>, %14, %cst_10 [1] : vector<4x1x256xf32> to vector<4x256xf32>
    %16 = tpu.iota {dimensions = array<i32: 0>} : vector<256x16xi32>
    %17 = tpu.iota {dimensions = array<i32: 1>} : vector<256x16xi32>
    %c4_i32 = arith.constant 4 : i32
    %18 = vector.broadcast %c4_i32 : i32 to vector<256x16xi32>
    %19 = arith.shrsi %16, %18 : vector<256x16xi32>
    %c15_i32 = arith.constant 15 : i32
    %20 = vector.broadcast %c15_i32 : i32 to vector<256x16xi32>
    %21 = arith.andi %16, %20 : vector<256x16xi32>
    %c2_i32 = arith.constant 2 : i32
    %22 = vector.broadcast %c2_i32 : i32 to vector<256x16xi32>
    %23 = arith.shrsi %17, %22 : vector<256x16xi32>
    %c3_i32 = arith.constant 3 : i32
    %24 = vector.broadcast %c3_i32 : i32 to vector<256x16xi32>
    %25 = arith.andi %17, %24 : vector<256x16xi32>
    %c2_i32_11 = arith.constant 2 : i32
    %26 = vector.broadcast %c2_i32_11 : i32 to vector<256x16xi32>
    %27 = arith.shrsi %19, %26 : vector<256x16xi32>
    %28 = arith.cmpi eq, %27, %23 : vector<256x16xi32>
    %c2_i32_12 = arith.constant 2 : i32
    %29 = vector.broadcast %c2_i32_12 : i32 to vector<256x16xi32>
    %30 = arith.shrsi %21, %29 : vector<256x16xi32>
    %31 = arith.cmpi eq, %30, %25 : vector<256x16xi32>
    %32 = arith.andi %28, %31 : vector<256x16xi1>
    %33 = arith.extui %32 : vector<256x16xi1> to vector<256x16xi32>
    %34 = arith.sitofp %33 : vector<256x16xi32> to vector<256x16xf32>
    %cst_13 = arith.constant dense<0.000000e+00> : vector<4x16xf32>
    %35 = tpu.matmul %15, %34, %cst_13 {dimension_numbers = #tpu.dot_dimension_numbers<[1], [0], [0], [1], [0, 0, 1, 1], [], []>} : vector<4x256xf32>, vector<256x16xf32>, vector<4x16xf32> -> vector<4x16xf32>
    %c0_14 = arith.constant 0 : index
    %c0_15 = arith.constant 0 : index
    %c0_16 = arith.constant 0 : index
    %36 = vector.load %arg4[%c0_14, %c0_15, %c0_16] : memref<4x4x16xf32, #tpu.memory_space<vmem>>, vector<4x4x16xf32>
    %37 = vector.shape_cast %35 : vector<4x16xf32> to vector<1x4x16xf32>
    %38 = vector.broadcast %37 : vector<1x4x16xf32> to vector<4x4x16xf32>
    %39 = arith.addf %38, %36 : vector<4x4x16xf32>
    %cst_17 = arith.constant dense<0xFF800000> : vector<4x16xf32>
    %40 = vector.multi_reduction <maximumf>, %39, %cst_17 [1] : vector<4x4x16xf32> to vector<4x16xf32>
    %41 = vector.shape_cast %40 : vector<4x16xf32> to vector<4x1x16xf32>
    %42 = vector.broadcast %41 : vector<4x1x16xf32> to vector<4x4x16xf32>
    %43 = arith.subf %39, %42 : vector<4x4x16xf32>
    %44 = math.exp %43 : vector<4x4x16xf32>
    %cst_18 = arith.constant dense<0.000000e+00> : vector<4x16xf32>
    %45 = vector.multi_reduction <add>, %44, %cst_18 [1] : vector<4x4x16xf32> to vector<4x16xf32>
    %46 = math.log %45 : vector<4x16xf32>
    %47 = vector.shape_cast %41 : vector<4x1x16xf32> to vector<4x16xf32>
    %48 = arith.addf %46, %47 : vector<4x16xf32>
    %49 = tpu.iota {dimensions = array<i32: 0>} : vector<16x4xi32>
    %50 = tpu.iota {dimensions = array<i32: 1>} : vector<16x4xi32>
    %c2_i32_19 = arith.constant 2 : i32
    %51 = vector.broadcast %c2_i32_19 : i32 to vector<16x4xi32>
    %52 = arith.shrsi %49, %51 : vector<16x4xi32>
    %c3_i32_20 = arith.constant 3 : i32
    %53 = vector.broadcast %c3_i32_20 : i32 to vector<16x4xi32>
    %54 = arith.andi %49, %53 : vector<16x4xi32>
    %c1_i32 = arith.constant 1 : i32
    %55 = vector.broadcast %c1_i32 : i32 to vector<16x4xi32>
    %56 = arith.shrsi %50, %55 : vector<16x4xi32>
    %c1_i32_21 = arith.constant 1 : i32
    %57 = vector.broadcast %c1_i32_21 : i32 to vector<16x4xi32>
    %58 = arith.andi %50, %57 : vector<16x4xi32>
    %c1_i32_22 = arith.constant 1 : i32
    %59 = vector.broadcast %c1_i32_22 : i32 to vector<16x4xi32>
    %60 = arith.shrsi %52, %59 : vector<16x4xi32>
    %61 = arith.cmpi eq, %60, %56 : vector<16x4xi32>
    %c1_i32_23 = arith.constant 1 : i32
    %62 = vector.broadcast %c1_i32_23 : i32 to vector<16x4xi32>
    %63 = arith.shrsi %54, %62 : vector<16x4xi32>
    %64 = arith.cmpi eq, %63, %58 : vector<16x4xi32>
    %65 = arith.andi %61, %64 : vector<16x4xi1>
    %66 = arith.extui %65 : vector<16x4xi1> to vector<16x4xi32>
    %67 = arith.sitofp %66 : vector<16x4xi32> to vector<16x4xf32>
    %cst_24 = arith.constant dense<0.000000e+00> : vector<4x4xf32>
    %68 = tpu.matmul %48, %67, %cst_24 {dimension_numbers = #tpu.dot_dimension_numbers<[1], [0], [0], [1], [0, 0, 1, 1], [], []>} : vector<4x16xf32>, vector<16x4xf32>, vector<4x4xf32> -> vector<4x4xf32>
    %c0_25 = arith.constant 0 : index
    %c0_26 = arith.constant 0 : index
    %c0_27 = arith.constant 0 : index
    %69 = vector.load %arg5[%c0_25, %c0_26, %c0_27] : memref<8x4x4xf32, #tpu.memory_space<vmem>>, vector<8x4x4xf32>
    %70 = vector.shape_cast %68 : vector<4x4xf32> to vector<1x4x4xf32>
    %71 = vector.broadcast %70 : vector<1x4x4xf32> to vector<8x4x4xf32>
    %72 = arith.addf %71, %69 : vector<8x4x4xf32>
    %cst_28 = arith.constant dense<0xFF800000> : vector<8x4xf32>
    %73 = vector.multi_reduction <maximumf>, %72, %cst_28 [1] : vector<8x4x4xf32> to vector<8x4xf32>
    %74 = vector.shape_cast %73 : vector<8x4xf32> to vector<8x1x4xf32>
    %75 = vector.broadcast %74 : vector<8x1x4xf32> to vector<8x4x4xf32>
    %76 = arith.subf %72, %75 : vector<8x4x4xf32>
    %77 = math.exp %76 : vector<8x4x4xf32>
    %cst_29 = arith.constant dense<0.000000e+00> : vector<8x4xf32>
    %78 = vector.multi_reduction <add>, %77, %cst_29 [1] : vector<8x4x4xf32> to vector<8x4xf32>
    %79 = math.log %78 : vector<8x4xf32>
    %80 = vector.shape_cast %74 : vector<8x1x4xf32> to vector<8x4xf32>
    %81 = arith.addf %79, %80 : vector<8x4xf32>
    %cst_30 = arith.constant dense<0.000000e+00> : vector<8xf32>
    %82 = vector.multi_reduction <add>, %81, %cst_30 [1] : vector<8x4xf32> to vector<8xf32>
    %83 = vector.shape_cast %82 : vector<8xf32> to vector<8x1xf32>
    %c0_31 = arith.constant 0 : index
    %c0_32 = arith.constant 0 : index
    %c0_33 = arith.constant 0 : index
    %84 = vector.load %arg6[%c0_31, %c0_32, %c0_33] : memref<1x8x1xf32, #tpu.memory_space<vmem>>, vector<1x8x1xf32>
    %85 = vector.shape_cast %83 : vector<8x1xf32> to vector<1x8x1xf32>
    %86 = arith.addf %85, %84 : vector<1x8x1xf32>
    %cst_34 = arith.constant dense<0xFF800000> : vector<1x1xf32>
    %87 = vector.multi_reduction <maximumf>, %86, %cst_34 [1] : vector<1x8x1xf32> to vector<1x1xf32>
    %88 = vector.shape_cast %87 : vector<1x1xf32> to vector<1x1x1xf32>
    %89 = vector.broadcast %88 : vector<1x1x1xf32> to vector<1x8x1xf32>
    %90 = arith.subf %86, %89 : vector<1x8x1xf32>
    %91 = math.exp %90 : vector<1x8x1xf32>
    %cst_35 = arith.constant dense<0.000000e+00> : vector<1x1xf32>
    %92 = vector.multi_reduction <add>, %91, %cst_35 [1] : vector<1x8x1xf32> to vector<1x1xf32>
    %93 = math.log %92 : vector<1x1xf32>
    %94 = vector.shape_cast %88 : vector<1x1x1xf32> to vector<1x1xf32>
    %95 = arith.addf %93, %94 : vector<1x1xf32>
    %96 = vector.shape_cast %95 : vector<1x1xf32> to vector<1x1x1xf32>
    %c0_36 = arith.constant 0 : index
    %c0_37 = arith.constant 0 : index
    %c0_38 = arith.constant 0 : index
    %97 = vector.load %arg7[%c0_36, %c0_37, %c0_38] : memref<1x1x1xf32, #tpu.memory_space<vmem>>, vector<1x1x1xf32>
    tpu.vector_store %arg7[%c0_36, %c0_37, %c0_38], %96 {strides = array<i32>} : memref<1x1x1xf32, #tpu.memory_space<vmem>>, vector<1x1x1xf32>,
    return
  }
  func.func @transform_0(%arg0: i32) -> (i32, i32, i32) {
    %c0_i32 = arith.constant 0 : i32
    %c0_i32_0 = arith.constant 0 : i32
    %c0_i32_1 = arith.constant 0 : i32
    return %arg0, %c0_i32, %c0_i32_0 : i32, i32, i32
  }
  func.func @transform_1(%arg0: i32) -> (i32, i32, i32) {
    %c0_i32 = arith.constant 0 : i32
    %c0_i32_0 = arith.constant 0 : i32
    %c0_i32_1 = arith.constant 0 : i32
    %c0_i32_2 = arith.constant 0 : i32
    return %c0_i32, %c0_i32_0, %c0_i32_1 : i32, i32, i32
  }
  func.func @transform_2(%arg0: i32) -> (i32, i32, i32) {
    %c0_i32 = arith.constant 0 : i32
    %c0_i32_0 = arith.constant 0 : i32
    %c0_i32_1 = arith.constant 0 : i32
    %c0_i32_2 = arith.constant 0 : i32
    return %c0_i32, %c0_i32_0, %c0_i32_1 : i32, i32, i32
  }
  func.func @transform_3(%arg0: i32) -> (i32, i32, i32) {
    %c0_i32 = arith.constant 0 : i32
    %c0_i32_0 = arith.constant 0 : i32
    %c0_i32_1 = arith.constant 0 : i32
    %c0_i32_2 = arith.constant 0 : i32
    return %c0_i32, %c0_i32_0, %c0_i32_1 : i32, i32, i32
  }
  func.func @transform_4(%arg0: i32) -> (i32, i32, i32) {
    %c0_i32 = arith.constant 0 : i32
    %c0_i32_0 = arith.constant 0 : i32
    %c0_i32_1 = arith.constant 0 : i32
    %c0_i32_2 = arith.constant 0 : i32
    return %c0_i32, %c0_i32_0, %c0_i32_1 : i32, i32, i32
  }
  func.func @transform_5(%arg0: i32) -> (i32, i32, i32) {
    %c0_i32 = arith.constant 0 : i32
    %c0_i32_0 = arith.constant 0 : i32
    %c0_i32_1 = arith.constant 0 : i32
    %c0_i32_2 = arith.constant 0 : i32
    return %c0_i32, %c0_i32_0, %c0_i32_1 : i32, i32, i32
  }
  func.func @transform_6(%arg0: i32) -> (i32, i32, i32) {
    %c0_i32 = arith.constant 0 : i32
    %c0_i32_0 = arith.constant 0 : i32
    %c0_i32_1 = arith.constant 0 : i32
    return %arg0, %c0_i32, %c0_i32_0 : i32, i32, i32
  }
}

</mosaic_0001>

<llo_original>
// kernel: tpu_custom_call.1
$region0: #{tpu_custom_call.1}
  #allocation0 [shape = 'u32[]', space=smem, size = 0x4, offset = 0x4, fixed_abs, tag = 'smem constant byte address 0x4 - core index']
  #allocation1 [shape = 'u32[144,128]{1,0:T(1,128)}', space=vmem, size = 0x12000, scoped, tag = 'internal scratch']
  %s0 = inlined_call_operand.vmem [shape: f32[2,1,256], index: 0, kind: input, shape index: {}]
  %s1 = inlined_call_operand.vmem [shape: f32[4,1,256], index: 1, kind: input, shape index: {}]
  %s2 = inlined_call_operand.vmem [shape: f32[4,1,256], index: 2, kind: input, shape index: {}]
  %s3 = inlined_call_operand.vmem [shape: f32[4,4,16], index: 3, kind: input, shape index: {}]
  %s4 = inlined_call_operand.vmem [shape: f32[8,4,4], index: 4, kind: input, shape index: {}]
  %s5 = inlined_call_operand.vmem [shape: f32[1,8,1], index: 5, kind: input, shape index: {}]
  %s6 = inlined_call_operand.vmem [shape: f32[2,1,1], index: 6, kind: output, shape index: {}]
  %s7 = sld [smem:[#allocation0]]
  $region57: #{tpu_custom_call.1} parent=0
    _
  %s9 = ssub.s32 1, %s7
  %s10 = scalar_select 0, %s9, %s7
  loop: start=0, step=1, limit=4
  $region2: #{tpu_custom_call.1} parent=0 // loop_pre_header
    _
  $region3: #{tpu_custom_call.1} parent=0 // loop_header
    %s12 = sphi 0, %s16
    %p13 = scmp.ge.s32.totalorder %s12, 4
    %s22 = sphi 0, %s24
    %s25 = sphi 0, %s22
    %s26 = sphi 0, %s25
    %s42 = sphi 0, %s26
    %s46 = sphi 0, %s46
    %s48 = sphi 0, %s46
    %s49 = sphi 0, %s48
    %s63 = sphi 0, %s49
    %s67 = sphi 0, %s67
    %s69 = sphi 0, %s67
    %s70 = sphi 0, %s69
    %s84 = sphi 0, %s70
    %s88 = sphi 0, %s88
    %s90 = sphi 0, %s88
    %s91 = sphi 0, %s90
    %s105 = sphi 0, %s91
    %s109 = sphi 0, %s109
    %s111 = sphi 0, %s109
    %s112 = sphi 0, %s111
    %s126 = sphi 0, %s112
    %s130 = sphi 0, %s130
    %s132 = sphi 0, %s130
    %s133 = sphi 0, %s132
    %s147 = sphi 0, %s133
    %s153 = sphi 0, %s155
    %s156 = sphi 0, %s153
    %s157 = sphi 0, %s156
    %s173 = sphi 0, %s157
  $region4: #{tpu_custom_call.1} parent=0 // loop_header_branch
    %15 = sbr.rel (%p13) target = $region8
  $region5: #{tpu_custom_call.1} parent=0 // loop_body
    %s17 = ssub.s32 %s12, 1
    %s18 = ssub.s32 %s12, 2
    %s19 = sadd.s32 %s12, 1
    %s20 = ssub.s32 %s12, %s19
    %p21 = scmp.eq.s32.totalorder %s20, 0
    %s23 = sadd.s32 %s22, 1
    %s24 = scalar_select %p21, %s22, %s23
    %p27 = pneg %p21
    %p28 = scmp.eq.s32.totalorder %s12, 1
    %p29 = por %p27, %p28
    %p30 = scmp.ne.s32.totalorder %s22, %s25
    %p31 = scmp.eq.s32.totalorder %s12, 0
    %p32 = por %p30, %p31
    %p33 = scmp.ne.s32.totalorder %s22, %s25
    %p34 = scmp.eq.s32.totalorder %s17, 1
    %p35 = por %p33, %p34
    %p36 = scmp.ne.s32.totalorder %s25, %s26
    %p37 = scmp.eq.s32.totalorder %s17, 0
    %p38 = por %p36, %p37
    %p39 = scmp.ne.s32.totalorder %s25, %s26
    %p40 = scmp.eq.s32.totalorder %s18, 1
    %p41 = por %p39, %p40
    %p43 = scmp.ne.s32.totalorder %s26, %s42
    %p44 = scmp.eq.s32.totalorder %s18, 0
    %p45 = por %p43, %p44
    %s47 = sadd.s32 %s46, 1
    %p50 = scmp.eq.s32.totalorder %s12, 1
    %p51 = scmp.ne.s32.totalorder %s46, %s48
    %p52 = scmp.eq.s32.totalorder %s12, 0
    %p53 = por %p51, %p52
    %p54 = scmp.ne.s32.totalorder %s46, %s48
    %p55 = scmp.eq.s32.totalorder %s17, 1
    %p56 = por %p54, %p55
    %p57 = scmp.ne.s32.totalorder %s48, %s49
    %p58 = scmp.eq.s32.totalorder %s17, 0
    %p59 = por %p57, %p58
    %p60 = scmp.ne.s32.totalorder %s48, %s49
    %p61 = scmp.eq.s32.totalorder %s18, 1
    %p62 = por %p60, %p61
    %p64 = scmp.ne.s32.totalorder %s49, %s63
    %p65 = scmp.eq.s32.totalorder %s18, 0
    %p66 = por %p64, %p65
    %s68 = sadd.s32 %s67, 1
    %p71 = scmp.eq.s32.totalorder %s12, 1
    %p72 = scmp.ne.s32.totalorder %s67, %s69
    %p73 = scmp.eq.s32.totalorder %s12, 0
    %p74 = por %p72, %p73
    %p75 = scmp.ne.s32.totalorder %s67, %s69
    %p76 = scmp.eq.s32.totalorder %s17, 1
    %p77 = por %p75, %p76
    %p78 = scmp.ne.s32.totalorder %s69, %s70
    %p79 = scmp.eq.s32.totalorder %s17, 0
    %p80 = por %p78, %p79
    %p81 = scmp.ne.s32.totalorder %s69, %s70
    %p82 = scmp.eq.s32.totalorder %s18, 1
    %p83 = por %p81, %p82
    %p85 = scmp.ne.s32.totalorder %s70, %s84
    %p86 = scmp.eq.s32.totalorder %s18, 0
    %p87 = por %p85, %p86
    %s89 = sadd.s32 %s88, 1
    %p92 = scmp.eq.s32.totalorder %s12, 1
    %p93 = scmp.ne.s32.totalorder %s88, %s90
    %p94 = scmp.eq.s32.totalorder %s12, 0
    %p95 = por %p93, %p94
    %p96 = scmp.ne.s32.totalorder %s88, %s90
    %p97 = scmp.eq.s32.totalorder %s17, 1
    %p98 = por %p96, %p97
    %p99 = scmp.ne.s32.totalorder %s90, %s91
    %p100 = scmp.eq.s32.totalorder %s17, 0
    %p101 = por %p99, %p100
    %p102 = scmp.ne.s32.totalorder %s90, %s91
    %p103 = scmp.eq.s32.totalorder %s18, 1
    %p104 = por %p102, %p103
    %p106 = scmp.ne.s32.totalorder %s91, %s105
    %p107 = scmp.eq.s32.totalorder %s18, 0
    %p108 = por %p106, %p107
    %s110 = sadd.s32 %s109, 1
    %p113 = scmp.eq.s32.totalorder %s12, 1
    %p114 = scmp.ne.s32.totalorder %s109, %s111
    %p115 = scmp.eq.s32.totalorder %s12, 0
    %p116 = por %p114, %p115
    %p117 = scmp.ne.s32.totalorder %s109, %s111
    %p118 = scmp.eq.s32.totalorder %s17, 1
    %p119 = por %p117, %p118
    %p120 = scmp.ne.s32.totalorder %s111, %s112
    %p121 = scmp.eq.s32.totalorder %s17, 0
    %p122 = por %p120, %p121
    %p123 = scmp.ne.s32.totalorder %s111, %s112
    %p124 = scmp.eq.s32.totalorder %s18, 1
    %p125 = por %p123, %p124
    %p127 = scmp.ne.s32.totalorder %s112, %s126
    %p128 = scmp.eq.s32.totalorder %s18, 0
    %p129 = por %p127, %p128
    %s131 = sadd.s32 %s130, 1
    %p134 = scmp.eq.s32.totalorder %s12, 1
    %p135 = scmp.ne.s32.totalorder %s130, %s132
    %p136 = scmp.eq.s32.totalorder %s12, 0
    %p137 = por %p135, %p136
    %p138 = scmp.ne.s32.totalorder %s130, %s132
    %p139 = scmp.eq.s32.totalorder %s17, 1
    %p140 = por %p138, %p139
    %p141 = scmp.ne.s32.totalorder %s132, %s133
    %p142 = scmp.eq.s32.totalorder %s17, 0
    %p143 = por %p141, %p142
    %p144 = scmp.ne.s32.totalorder %s132, %s133
    %p145 = scmp.eq.s32.totalorder %s18, 1
    %p146 = por %p144, %p145
    %p148 = scmp.ne.s32.totalorder %s133, %s147
    %p149 = scmp.eq.s32.totalorder %s18, 0
    %p150 = por %p148, %p149
    %s151 = ssub.s32 %s12, %s19
    %p152 = scmp.eq.s32.totalorder %s151, 0
    %s154 = sadd.s32 %s153, 1
    %s155 = scalar_select %p152, %s153, %s154
    %p158 = pneg %p152
    %p159 = scmp.eq.s32.totalorder %s12, 1
    %p160 = por %p158, %p159
    %p161 = scmp.ne.s32.totalorder %s153, %s156
    %p162 = scmp.eq.s32.totalorder %s12, 0
    %p163 = por %p161, %p162
    %p164 = scmp.ne.s32.totalorder %s153, %s156
    %p165 = scmp.eq.s32.totalorder %s17, 1
    %p166 = por %p164, %p165
    %p167 = scmp.ne.s32.totalorder %s156, %s157
    %p168 = scmp.eq.s32.totalorder %s17, 0
    %p169 = por %p167, %p168
    %p170 = scmp.ne.s32.totalorder %s156, %s157
    %p171 = scmp.eq.s32.totalorder %s18, 1
    %p172 = por %p170, %p171
    %p174 = scmp.ne.s32.totalorder %s157, %s173
    %p175 = scmp.eq.s32.totalorder %s18, 0
    %p176 = por %p174, %p175
    %p177 = scmp.le.s32.totalorder 1, %s12
    %p178 = scmp.lt.s32.totalorder %s12, 3
    %p179 = pnand %p177, %p178
    %p180 = pneg %p179
    // Predicated region
    $region9: #{tpu_custom_call.1} parent=5 // pred_check
      _
    $region10: #{tpu_custom_call.1} parent=5 // pred_check_branch
      %182 = sbr.rel (%p179) target = $region12
    $region11: #{tpu_custom_call.1} parent=5 // pred_region
      %s183 = ssub.s32 %s12, 1
      // Predicated region
      $region13: #{tpu_custom_call.1} parent=11 // pred_check
        %p184 = pneg %p59
      $region14: #{tpu_custom_call.1} parent=11 // pred_check_branch
        %186 = sbr.rel (%p184) target = $region16
      $region15: #{tpu_custom_call.1} parent=11 // pred_region
        _
      $region16: #{tpu_custom_call.1} parent=11 // pred_fallthru
        _
      // Predicated region
      $region17: #{tpu_custom_call.1} parent=11 // pred_check
        %p187 = pneg %p80
      $region18: #{tpu_custom_call.1} parent=11 // pred_check_branch
        %189 = sbr.rel (%p187) target = $region20
      $region19: #{tpu_custom_call.1} parent=11 // pred_region
        _
      $region20: #{tpu_custom_call.1} parent=11 // pred_fallthru
        _
      // Predicated region
      $region21: #{tpu_custom_call.1} parent=11 // pred_check
        %p190 = pneg %p101
      $region22: #{tpu_custom_call.1} parent=11 // pred_check_branch
        %192 = sbr.rel (%p190) target = $region24
      $region23: #{tpu_custom_call.1} parent=11 // pred_region
        _
      $region24: #{tpu_custom_call.1} parent=11 // pred_fallthru
        _
      // Predicated region
      $region25: #{tpu_custom_call.1} parent=11 // pred_check
        %p193 = pneg %p122
      $region26: #{tpu_custom_call.1} parent=11 // pred_check_branch
        %195 = sbr.rel (%p193) target = $region28
      $region27: #{tpu_custom_call.1} parent=11 // pred_region
        _
      $region28: #{tpu_custom_call.1} parent=11 // pred_fallthru
        _
      // Predicated region
      $region29: #{tpu_custom_call.1} parent=11 // pred_check
        %p196 = pneg %p143
      $region30: #{tpu_custom_call.1} parent=11 // pred_check_branch
        %198 = sbr.rel (%p196) target = $region32
      $region31: #{tpu_custom_call.1} parent=11 // pred_region
        _
      $region32: #{tpu_custom_call.1} parent=11 // pred_fallthru
        _
    $region12: #{tpu_custom_call.1} parent=5 // pred_fallthru
      _
    %p199 = scmp.lt.s32.totalorder %s12, 2
    // Predicated region
    $region33: #{tpu_custom_call.1} parent=5 // pred_check
      %p200 = pneg %p199
    $region34: #{tpu_custom_call.1} parent=5 // pred_check_branch
      %202 = sbr.rel (%p200) target = $region36
    $region35: #{tpu_custom_call.1} parent=5 // pred_region
      // Predicated region
      $region37: #{tpu_custom_call.1} parent=35 // pred_check
        %p203 = pneg %p32
      $region38: #{tpu_custom_call.1} parent=35 // pred_check_branch
        %205 = sbr.rel (%p203) target = $region40
      $region39: #{tpu_custom_call.1} parent=35 // pred_region
        %p206 = scmp.lt.s32.totalorder %s12, 1
        %s207 = scalar_select %p206, %s12, 1
        %s208 = smul.addr %s207, 2
        %s209 = scalar_lea.vmem %s0, %s208
      $region40: #{tpu_custom_call.1} parent=35 // pred_fallthru
        _
    $region36: #{tpu_custom_call.1} parent=5 // pred_fallthru
      _
    %p210 = scmp.le.s32.totalorder 1, %s12
    %p211 = scmp.lt.s32.totalorder %s12, 3
    %p212 = pnand %p210, %p211
    %p213 = pneg %p212
    // Predicated region
    $region41: #{tpu_custom_call.1} parent=5 // pred_check
      _
    $region42: #{tpu_custom_call.1} parent=5 // pred_check_branch
      %215 = sbr.rel (%p212) target = $region44
    $region43: #{tpu_custom_call.1} parent=5 // pred_region
      %s216 = ssub.s32 %s12, 1
      %p217 = scmp.lt.s32.totalorder %s17, 1
      %s218 = scalar_select %p217, %s17, 1
      %s219 = smul.addr %s218, 2
      %s220 = scalar_lea.vmem %s0, %s219
      %p221 = pneg %p38
      %p222 = pneg %p35
      %p223 = pneg %p59
      %p224 = pneg %p56
      %p225 = pneg %p80
      %p226 = pneg %p77
      %p227 = pneg %p101
      %p228 = pneg %p98
      %p229 = pneg %p122
      %p230 = pneg %p119
      %p231 = pneg %p143
      %p232 = pneg %p140
      %p233 = pneg %p169
      %p234 = pneg %p166
      %p235 = scmp.lt.s32.totalorder %s17, 1
      %s236 = scalar_select %p235, %s17, 1
      %s237 = scalar_lea.vmem %s6, %s236
      %p238 = scmp.lt.s32.totalorder %s17, 1
      %s239 = scalar_select %p238, %s17, 1
      %s240 = smul.addr %s239, 2
      %s241 = scalar_lea.vmem %s0, %s240
      %p242 = scmp.lt.s32.totalorder %s17, 1
      %s243 = scalar_select %p242, %s17, 1
      %s244 = scalar_lea.vmem %s6, %s243
      %v245 = vld [vmem:[%s241] sm:$0x3]
      %v246 = vld [vmem:[%s1] sm:$0x3]
      %v247 = vld [vmem:[%s1 + $0x2] sm:$0x3]
      %v248 = vld [vmem:[%s1 + $0x4] sm:$0x3]
      %v249 = vld [vmem:[%s1 + $0x6] sm:$0x3]
      %v250 = vld [vmem:[%s2] sm:$0x3]
      %v251 = vld [vmem:[%s2 + $0x2] sm:$0x3]
      %v252 = vld [vmem:[%s2 + $0x4] sm:$0x3]
      %v253 = vld [vmem:[%s2 + $0x6] sm:$0x3]
      %v254 = vsub.f32 %v245, %v246
      %v255 = vsub.f32 %v245, %v247
      %v256 = vsub.f32 %v245, %v248
      %v257 = vsub.f32 %v245, %v249
      %v258 = vsub.f32 0.0, %v250
      %v259 = vsub.f32 0.0, %v251
      %v260 = vsub.f32 0.0, %v252
      %v261 = vsub.f32 0.0, %v253
      %v262 = vmul.f32 %v258, 1.442695
      %v263 = vpow.pop %v262
      %v264 = vmul.f32 %v259, 1.442695
      %v265 = vpow.pop %v264
      %v266 = vmul.f32 %v260, 1.442695
      %v267 = vpow.pop %v266
      %v268 = vmul.f32 %v261, 1.442695
      %v269 = vpow.pop %v268
      %v270 = vmul.f32 %v254, %v263
      %v271 = vmul.f32 %v255, %v265
      %v272 = vmul.f32 %v256, %v267
      %v273 = vmul.f32 %v257, %v269
      %v274 = vmul.f32 %v270, -0.5
      %v275 = vmul.f32 %v271, -0.5
      %v276 = vmul.f32 %v272, -0.5
      %v277 = vmul.f32 %v273, -0.5
      %v278 = vmul.f32 %v274, %v270
      %v279 = vmul.f32 %v275, %v271
      %v280 = vmul.f32 %v276, %v272
      %v281 = vmul.f32 %v277, %v273
      %v282 = vsub.f32 %v278, %v250
      %v283 = vsub.f32 %v279, %v251
      %v284 = vsub.f32 %v280, %v252
      %v285 = vsub.f32 %v281, %v253
      %v286 = vsub.f32 %v282, 0.9189385
      %v287 = vsub.f32 %v283, 0.9189385
      %v288 = vsub.f32 %v284, 0.9189385
      %v289 = vsub.f32 %v285, 0.9189385
      %v290 = vadd.f32 %v286, 0.0
      %v291 = vadd.f32 %v287, 0.0
      %v292 = vadd.f32 %v288, 0.0
      %v293 = vadd.f32 %v289, 0.0
      %v294 = vlaneseq
      %v295 = vshrl.u32 %v294, 7
      %v296 = vadd.s32 %v295, 8
      %v297 = vadd.s32 %v295, 16
      %v298 = vadd.s32 %v295, 24
      %v299 = vadd.s32 %v295, 32
      %v300 = vadd.s32 %v295, 40
      %v301 = vadd.s32 %v295, 48
      %v302 = vadd.s32 %v295, 56
      %v303 = vadd.s32 %v295, 64
      %v304 = vadd.s32 %v295, 72
      %v305 = vadd.s32 %v295, 80
      %v306 = vadd.s32 %v295, 88
      %v307 = vadd.s32 %v295, 96
      %v308 = vadd.s32 %v295, 104
      %v309 = vadd.s32 %v295, 112
      %v310 = vadd.s32 %v295, 120
      %v311 = vadd.s32 %v295, 128
      %v312 = vadd.s32 %v295, 136
      %v313 = vadd.s32 %v295, 144
      %v314 = vadd.s32 %v295, 152
      %v315 = vadd.s32 %v295, 160
      %v316 = vadd.s32 %v295, 168
      %v317 = vadd.s32 %v295, 176
      %v318 = vadd.s32 %v295, 184
      %v319 = vadd.s32 %v295, 192
      %v320 = vadd.s32 %v295, 200
      %v321 = vadd.s32 %v295, 208
      %v322 = vadd.s32 %v295, 216
      %v323 = vadd.s32 %v295, 224
      %v324 = vadd.s32 %v295, 232
      %v325 = vadd.s32 %v295, 240
      %v326 = vadd.s32 %v295, 248
      %v327 = vlaneseq
      %v328 = vand.u32 %v327, 127
      %v329 = vshra.s32 %v295, 4
      %v330 = vshra.s32 %v296, 4
      %v331 = vshra.s32 %v297, 4
      %v332 = vshra.s32 %v298, 4
      %v333 = vshra.s32 %v299, 4
      %v334 = vshra.s32 %v300, 4
      %v335 = vshra.s32 %v301, 4
      %v336 = vshra.s32 %v302, 4
      %v337 = vshra.s32 %v303, 4
      %v338 = vshra.s32 %v304, 4
      %v339 = vshra.s32 %v305, 4
      %v340 = vshra.s32 %v306, 4
      %v341 = vshra.s32 %v307, 4
      %v342 = vshra.s32 %v308, 4
      %v343 = vshra.s32 %v309, 4
      %v344 = vshra.s32 %v310, 4
      %v345 = vshra.s32 %v311, 4
      %v346 = vshra.s32 %v312, 4
      %v347 = vshra.s32 %v313, 4
      %v348 = vshra.s32 %v314, 4
      %v349 = vshra.s32 %v315, 4
      %v350 = vshra.s32 %v316, 4
      %v351 = vshra.s32 %v317, 4
      %v352 = vshra.s32 %v318, 4
      %v353 = vshra.s32 %v319, 4
      %v354 = vshra.s32 %v320, 4
      %v355 = vshra.s32 %v321, 4
      %v356 = vshra.s32 %v322, 4
      %v357 = vshra.s32 %v323, 4
      %v358 = vshra.s32 %v324, 4
      %v359 = vshra.s32 %v325, 4
      %v360 = vshra.s32 %v326, 4
      %v361 = vand.u32 %v295, 15
      %v362 = vand.u32 %v296, 15
      %v363 = vand.u32 %v297, 15
      %v364 = vand.u32 %v298, 15
      %v365 = vand.u32 %v299, 15
      %v366 = vand.u32 %v300, 15
      %v367 = vand.u32 %v301, 15
      %v368 = vand.u32 %v302, 15
      %v369 = vand.u32 %v303, 15
      %v370 = vand.u32 %v304, 15
      %v371 = vand.u32 %v305, 15
      %v372 = vand.u32 %v306, 15
      %v373 = vand.u32 %v307, 15
      %v374 = vand.u32 %v308, 15
      %v375 = vand.u32 %v309, 15
      %v376 = vand.u32 %v310, 15
      %v377 = vand.u32 %v311, 15
      %v378 = vand.u32 %v312, 15
      %v379 = vand.u32 %v313, 15
      %v380 = vand.u32 %v314, 15
      %v381 = vand.u32 %v315, 15
      %v382 = vand.u32 %v316, 15
      %v383 = vand.u32 %v317, 15
      %v384 = vand.u32 %v318, 15
      %v385 = vand.u32 %v319, 15
      %v386 = vand.u32 %v320, 15
      %v387 = vand.u32 %v321, 15
      %v388 = vand.u32 %v322, 15
      %v389 = vand.u32 %v323, 15
      %v390 = vand.u32 %v324, 15
      %v391 = vand.u32 %v325, 15
      %v392 = vand.u32 %v326, 15
      %v393 = vshra.s32 %v328, 2
      %v394 = vand.u32 %v328, 3
      %v395 = vshra.s32 %v329, 2
      %v396 = vshra.s32 %v330, 2
      %v397 = vshra.s32 %v331, 2
      %v398 = vshra.s32 %v332, 2
      %v399 = vshra.s32 %v333, 2
      %v400 = vshra.s32 %v334, 2
      %v401 = vshra.s32 %v335, 2
      %v402 = vshra.s32 %v336, 2
      %v403 = vshra.s32 %v337, 2
      %v404 = vshra.s32 %v338, 2
      %v405 = vshra.s32 %v339, 2
      %v406 = vshra.s32 %v340, 2
      %v407 = vshra.s32 %v341, 2
      %v408 = vshra.s32 %v342, 2
      %v409 = vshra.s32 %v343, 2
      %v410 = vshra.s32 %v344, 2
      %v411 = vshra.s32 %v345, 2
      %v412 = vshra.s32 %v346, 2
      %v413 = vshra.s32 %v347, 2
      %v414 = vshra.s32 %v348, 2
      %v415 = vshra.s32 %v349, 2
      %v416 = vshra.s32 %v350, 2
      %v417 = vshra.s32 %v351, 2
      %v418 = vshra.s32 %v352, 2
      %v419 = vshra.s32 %v353, 2
      %v420 = vshra.s32 %v354, 2
      %v421 = vshra.s32 %v355, 2
      %v422 = vshra.s32 %v356, 2
      %v423 = vshra.s32 %v357, 2
      %v424 = vshra.s32 %v358, 2
      %v425 = vshra.s32 %v359, 2
      %v426 = vshra.s32 %v360, 2
      %vm427 = vcmp.eq.s32.totalorder %v395, %v393
      %vm428 = vcmp.eq.s32.totalorder %v396, %v393
      %vm429 = vcmp.eq.s32.totalorder %v397, %v393
      %vm430 = vcmp.eq.s32.totalorder %v398, %v393
      %vm431 = vcmp.eq.s32.totalorder %v399, %v393
      %vm432 = vcmp.eq.s32.totalorder %v400, %v393
      %vm433 = vcmp.eq.s32.totalorder %v401, %v393
      %vm434 = vcmp.eq.s32.totalorder %v402, %v393
      %vm435 = vcmp.eq.s32.totalorder %v403, %v393
      %vm436 = vcmp.eq.s32.totalorder %v404, %v393
      %vm437 = vcmp.eq.s32.totalorder %v405, %v393
      %vm438 = vcmp.eq.s32.totalorder %v406, %v393
      %vm439 = vcmp.eq.s32.totalorder %v407, %v393
      %vm440 = vcmp.eq.s32.totalorder %v408, %v393
      %vm441 = vcmp.eq.s32.totalorder %v409, %v393
      %vm442 = vcmp.eq.s32.totalorder %v410, %v393
      %vm443 = vcmp.eq.s32.totalorder %v411, %v393
      %vm444 = vcmp.eq.s32.totalorder %v412, %v393
      %vm445 = vcmp.eq.s32.totalorder %v413, %v393
      %vm446 = vcmp.eq.s32.totalorder %v414, %v393
      %vm447 = vcmp.eq.s32.totalorder %v415, %v393
      %vm448 = vcmp.eq.s32.totalorder %v416, %v393
      %vm449 = vcmp.eq.s32.totalorder %v417, %v393
      %vm450 = vcmp.eq.s32.totalorder %v418, %v393
      %vm451 = vcmp.eq.s32.totalorder %v419, %v393
      %vm452 = vcmp.eq.s32.totalorder %v420, %v393
      %vm453 = vcmp.eq.s32.totalorder %v421, %v393
      %vm454 = vcmp.eq.s32.totalorder %v422, %v393
      %vm455 = vcmp.eq.s32.totalorder %v423, %v393
      %vm456 = vcmp.eq.s32.totalorder %v424, %v393
      %vm457 = vcmp.eq.s32.totalorder %v425, %v393
      %vm458 = vcmp.eq.s32.totalorder %v426, %v393
      %v459 = vshra.s32 %v361, 2
      %v460 = vshra.s32 %v362, 2
      %v461 = vshra.s32 %v363, 2
      %v462 = vshra.s32 %v364, 2
      %v463 = vshra.s32 %v365, 2
      %v464 = vshra.s32 %v366, 2
      %v465 = vshra.s32 %v367, 2
      %v466 = vshra.s32 %v368, 2
      %v467 = vshra.s32 %v369, 2
      %v468 = vshra.s32 %v370, 2
      %v469 = vshra.s32 %v371, 2
      %v470 = vshra.s32 %v372, 2
      %v471 = vshra.s32 %v373, 2
      %v472 = vshra.s32 %v374, 2
      %v473 = vshra.s32 %v375, 2
      %v474 = vshra.s32 %v376, 2
      %v475 = vshra.s32 %v377, 2
      %v476 = vshra.s32 %v378, 2
      %v477 = vshra.s32 %v379, 2
      %v478 = vshra.s32 %v380, 2
      %v479 = vshra.s32 %v381, 2
      %v480 = vshra.s32 %v382, 2
      %v481 = vshra.s32 %v383, 2
      %v482 = vshra.s32 %v384, 2
      %v483 = vshra.s32 %v385, 2
      %v484 = vshra.s32 %v386, 2
      %v485 = vshra.s32 %v387, 2
      %v486 = vshra.s32 %v388, 2
      %v487 = vshra.s32 %v389, 2
      %v488 = vshra.s32 %v390, 2
      %v489 = vshra.s32 %v391, 2
      %v490 = vshra.s32 %v392, 2
      %vm491 = vcmp.eq.s32.totalorder %v459, %v394
      %vm492 = vcmp.eq.s32.totalorder %v460, %v394
      %vm493 = vcmp.eq.s32.totalorder %v461, %v394
      %vm494 = vcmp.eq.s32.totalorder %v462, %v394
      %vm495 = vcmp.eq.s32.totalorder %v463, %v394
      %vm496 = vcmp.eq.s32.totalorder %v464, %v394
      %vm497 = vcmp.eq.s32.totalorder %v465, %v394
      %vm498 = vcmp.eq.s32.totalorder %v466, %v394
      %vm499 = vcmp.eq.s32.totalorder %v467, %v394
      %vm500 = vcmp.eq.s32.totalorder %v468, %v394
      %vm501 = vcmp.eq.s32.totalorder %v469, %v394
      %vm502 = vcmp.eq.s32.totalorder %v470, %v394
      %vm503 = vcmp.eq.s32.totalorder %v471, %v394
      %vm504 = vcmp.eq.s32.totalorder %v472, %v394
      %vm505 = vcmp.eq.s32.totalorder %v473, %v394
      %vm506 = vcmp.eq.s32.totalorder %v474, %v394
      %vm507 = vcmp.eq.s32.totalorder %v475, %v394
      %vm508 = vcmp.eq.s32.totalorder %v476, %v394
      %vm509 = vcmp.eq.s32.totalorder %v477, %v394
      %vm510 = vcmp.eq.s32.totalorder %v478, %v394
      %vm511 = vcmp.eq.s32.totalorder %v479, %v394
      %vm512 = vcmp.eq.s32.totalorder %v480, %v394
      %vm513 = vcmp.eq.s32.totalorder %v481, %v394
      %vm514 = vcmp.eq.s32.totalorder %v482, %v394
      %vm515 = vcmp.eq.s32.totalorder %v483, %v394
      %vm516 = vcmp.eq.s32.totalorder %v484, %v394
      %vm517 = vcmp.eq.s32.totalorder %v485, %v394
      %vm518 = vcmp.eq.s32.totalorder %v486, %v394
      %vm519 = vcmp.eq.s32.totalorder %v487, %v394
      %vm520 = vcmp.eq.s32.totalorder %v488, %v394
      %vm521 = vcmp.eq.s32.totalorder %v489, %v394
      %vm522 = vcmp.eq.s32.totalorder %v490, %v394
      %vm523 = vmand %vm427, %vm491
      %vm524 = vmand %vm428, %vm492
      %vm525 = vmand %vm429, %vm493
      %vm526 = vmand %vm430, %vm494
      %vm527 = vmand %vm431, %vm495
      %vm528 = vmand %vm432, %vm496
      %vm529 = vmand %vm433, %vm497
      %vm530 = vmand %vm434, %vm498
      %vm531 = vmand %vm435, %vm499
      %vm532 = vmand %vm436, %vm500
      %vm533 = vmand %vm437, %vm501
      %vm534 = vmand %vm438, %vm502
      %vm535 = vmand %vm439, %vm503
      %vm536 = vmand %vm440, %vm504
      %vm537 = vmand %vm441, %vm505
      %vm538 = vmand %vm442, %vm506
      %vm539 = vmand %vm443, %vm507
      %vm540 = vmand %vm444, %vm508
      %vm541 = vmand %vm445, %vm509
      %vm542 = vmand %vm446, %vm510
      %vm543 = vmand %vm447, %vm511
      %vm544 = vmand %vm448, %vm512
      %vm545 = vmand %vm449, %vm513
      %vm546 = vmand %vm450, %vm514
      %vm547 = vmand %vm451, %vm515
      %vm548 = vmand %vm452, %vm516
      %vm549 = vmand %vm453, %vm517
      %vm550 = vmand %vm454, %vm518
      %vm551 = vmand %vm455, %vm519
      %vm552 = vmand %vm456, %vm520
      %vm553 = vmand %vm457, %vm521
      %vm554 = vmand %vm458, %vm522
      %v555 = vsel %vm523, 1, 0
      %v556 = vsel %vm524, 1, 0
      %v557 = vsel %vm525, 1, 0
      %v558 = vsel %vm526, 1, 0
      %v559 = vsel %vm527, 1, 0
      %v560 = vsel %vm528, 1, 0
      %v561 = vsel %vm529, 1, 0
      %v562 = vsel %vm530, 1, 0
      %v563 = vsel %vm531, 1, 0
      %v564 = vsel %vm532, 1, 0
      %v565 = vsel %vm533, 1, 0
      %v566 = vsel %vm534, 1, 0
      %v567 = vsel %vm535, 1, 0
      %v568 = vsel %vm536, 1, 0
      %v569 = vsel %vm537, 1, 0
      %v570 = vsel %vm538, 1, 0
      %v571 = vsel %vm539, 1, 0
      %v572 = vsel %vm540, 1, 0
      %v573 = vsel %vm541, 1, 0
      %v574 = vsel %vm542, 1, 0
      %v575 = vsel %vm543, 1, 0
      %v576 = vsel %vm544, 1, 0
      %v577 = vsel %vm545, 1, 0
      %v578 = vsel %vm546, 1, 0
      %v579 = vsel %vm547, 1, 0
      %v580 = vsel %vm548, 1, 0
      %v581 = vsel %vm549, 1, 0
      %v582 = vsel %vm550, 1, 0
      %v583 = vsel %vm551, 1, 0
      %v584 = vsel %vm552, 1, 0
      %v585 = vsel %vm553, 1, 0
      %v586 = vsel %vm554, 1, 0
      %v587 = vcvt.s32.f32 %v555
      %v588 = vcvt.s32.f32 %v556
      %v589 = vcvt.s32.f32 %v557
      %v590 = vcvt.s32.f32 %v558
      %v591 = vcvt.s32.f32 %v559
      %v592 = vcvt.s32.f32 %v560
      %v593 = vcvt.s32.f32 %v561
      %v594 = vcvt.s32.f32 %v562
      %v595 = vcvt.s32.f32 %v563
      %v596 = vcvt.s32.f32 %v564
      %v597 = vcvt.s32.f32 %v565
      %v598 = vcvt.s32.f32 %v566
      %v599 = vcvt.s32.f32 %v567
      %v600 = vcvt.s32.f32 %v568
      %v601 = vcvt.s32.f32 %v569
      %v602 = vcvt.s32.f32 %v570
      %v603 = vcvt.s32.f32 %v571
      %v604 = vcvt.s32.f32 %v572
      %v605 = vcvt.s32.f32 %v573
      %v606 = vcvt.s32.f32 %v574
      %v607 = vcvt.s32.f32 %v575
      %v608 = vcvt.s32.f32 %v576
      %v609 = vcvt.s32.f32 %v577
      %v610 = vcvt.s32.f32 %v578
      %v611 = vcvt.s32.f32 %v579
      %v612 = vcvt.s32.f32 %v580
      %v613 = vcvt.s32.f32 %v581
      %v614 = vcvt.s32.f32 %v582
      %v615 = vcvt.s32.f32 %v583
      %v616 = vcvt.s32.f32 %v584
      %v617 = vcvt.s32.f32 %v585
      %v618 = vcvt.s32.f32 %v586
      %v623 = vcombine.low %v290, %v291
      %v624 = vcombine.low %v292, %v293
      %v626 = vunpack.c.l.s4 1966171168
      %v627 = vunpack.c.0.s8 %v626
      %v628 = vlaneseq
      %v629 = vshrl.u32 %v628, 7
      %v630 = vsub.s32 %v627, %v629
      %v631 = vrot.slane %v623, %v630
      %v633 = vunpack.c.l.s4 1966171168
      %v634 = vunpack.c.0.s8 %v633
      %v635 = vlaneseq
      %v636 = vshrl.u32 %v635, 7
      %v637 = vsub.s32 %v634, %v636
      %v638 = vrot.slane %v624, %v637
      %v639 = vcombine.low %v631, %v638
      %v640 = vcombine.high %v631, %v638
      %v642 = vunpack.c.l.s4 1966171168
      %v643 = vunpack.c.0.s8 %v642
      %v644 = vlaneseq
      %v645 = vshrl.u32 %v644, 7
      %v646 = vsub.s32 %v643, %v645
      %v647 = vrot.slane %v639, %v646
      %v649 = vunpack.c.l.s4 1966171168
      %v650 = vunpack.c.0.s8 %v649
      %v651 = vlaneseq
      %v652 = vshrl.u32 %v651, 7
      %v653 = vsub.s32 %v650, %v652
      %v654 = vrot.slane %v640, %v653
      %657 = vmatprep.subr.mxu0 0.0
      %658 = vmatpush1.msra.mxu0 %v602
      %659 = vmatprep.subr.mxu0 0.0
      %660 = vmatpush1.msra.mxu0 %v601
      %661 = vmatprep.subr.mxu0 0.0
      %662 = vmatpush1.msra.mxu0 %v600
      %663 = vmatprep.subr.mxu0 0.0
      %664 = vmatpush1.msra.mxu0 %v599
      %665 = vmatprep.subr.mxu0 0.0
      %666 = vmatpush1.msra.mxu0 %v598
      %667 = vmatprep.subr.mxu0 0.0
      %668 = vmatpush1.msra.mxu0 %v597
      %669 = vmatprep.subr.mxu0 0.0
      %670 = vmatpush1.msra.mxu0 %v596
      %671 = vmatprep.subr.mxu0 0.0
      %672 = vmatpush1.msra.mxu0 %v595
      %673 = vmatprep.subr.mxu0 0.0
      %674 = vmatpush1.msra.mxu0 %v594
      %675 = vmatprep.subr.mxu0 0.0
      %676 = vmatpush1.msra.mxu0 %v593
      %677 = vmatprep.subr.mxu0 0.0
      %678 = vmatpush1.msra.mxu0 %v592
      %679 = vmatprep.subr.mxu0 0.0
      %680 = vmatpush1.msra.mxu0 %v591
      %681 = vmatprep.subr.mxu0 0.0
      %682 = vmatpush1.msra.mxu0 %v590
      %683 = vmatprep.subr.mxu0 0.0
      %684 = vmatpush1.msra.mxu0 %v589
      %685 = vmatprep.subr.mxu0 0.0
      %686 = vmatpush1.msra.mxu0 %v588
      %687 = vmatprep.subr.mxu0 0.0
      %688 = vmatpush1.msra.mxu0 %v587
      %689 = vmatprep.subr.mxu0 0.0
      %690 = vmatpush2.msra.mxu0 %v618
      %691 = vmatprep.subr.mxu0 0.0
      %692 = vmatpush2.msra.mxu0 %v617
      %693 = vmatprep.subr.mxu0 0.0
      %694 = vmatpush2.msra.mxu0 %v616
      %695 = vmatprep.subr.mxu0 0.0
      %696 = vmatpush2.msra.mxu0 %v615
      %697 = vmatprep.subr.mxu0 0.0
      %698 = vmatpush2.msra.mxu0 %v614
      %699 = vmatprep.subr.mxu0 0.0
      %700 = vmatpush2.msra.mxu0 %v613
      %701 = vmatprep.subr.mxu0 0.0
      %702 = vmatpush2.msra.mxu0 %v612
      %703 = vmatprep.subr.mxu0 0.0
      %704 = vmatpush2.msra.mxu0 %v611
      %705 = vmatprep.subr.mxu0 0.0
      %706 = vmatpush2.msra.mxu0 %v610
      %707 = vmatprep.subr.mxu0 0.0
      %708 = vmatpush2.msra.mxu0 %v609
      %709 = vmatprep.subr.mxu0 0.0
      %710 = vmatpush2.msra.mxu0 %v608
      %711 = vmatprep.subr.mxu0 0.0
      %712 = vmatpush2.msra.mxu0 %v607
      %713 = vmatprep.subr.mxu0 0.0
      %714 = vmatpush2.msra.mxu0 %v606
      %715 = vmatprep.subr.mxu0 0.0
      %716 = vmatpush2.msra.mxu0 %v605
      %717 = vmatprep.subr.mxu0 0.0
      %718 = vmatpush2.msra.mxu0 %v604
      %719 = vmatprep.subr.mxu0 0.0
      %720 = vmatpush2.msra.mxu0 %v603
      %721 = vmatprep.mubr.f32.mxu0 %v654
      %722 = vmatmul.mubr.f32.gmra.mxu0 %v647
      %v723 = vpop.f32.mrf.mxu0
      %v724 = vadd.f32 0.0, %v723
      %v725 = vpop.f32.mrf.mxu0
      %726 = vdwg.mxu0
      %v727 = vld [vmem:[%s3] sm:$0xf]
      %v728 = vld [vmem:[%s3 + $0x4] sm:$0xf]
      %v729 = vld [vmem:[%s3 + $0x8] sm:$0xf]
      %v730 = vld [vmem:[%s3 + $0xc] sm:$0xf]
      %v731 = vadd.f32 %v724, %v727
      %v732 = vadd.f32 %v724, %v728
      %v733 = vadd.f32 %v724, %v729
      %v734 = vadd.f32 %v724, %v730
      %vm735 = vcmask 125952
      %v736 = vsel %vm735, %v731, -inf
      %v737 = vrot.slane %v736, 4
      %v738 = vmax.f32 %v736, %v737
      %v739 = vrot.slane %v738, 2
      %v740 = vmax.f32 %v738, %v739
      %v741 = vrot.slane %v740, 1
      %v742 = vmax.f32 %v740, %v741
      %v743 = vsel %vm735, %v732, -inf
      %v744 = vrot.slane %v743, 4
      %v745 = vmax.f32 %v743, %v744
      %v746 = vrot.slane %v745, 2
      %v747 = vmax.f32 %v745, %v746
      %v748 = vrot.slane %v747, 1
      %v749 = vmax.f32 %v747, %v748
      %v750 = vsel %vm735, %v733, -inf
      %v751 = vrot.slane %v750, 4
      %v752 = vmax.f32 %v750, %v751
      %v753 = vrot.slane %v752, 2
      %v754 = vmax.f32 %v752, %v753
      %v755 = vrot.slane %v754, 1
      %v756 = vmax.f32 %v754, %v755
      %v757 = vsel %vm735, %v734, -inf
      %v758 = vrot.slane %v757, 4
      %v759 = vmax.f32 %v757, %v758
      %v760 = vrot.slane %v759, 2
      %v761 = vmax.f32 %v759, %v760
      %v762 = vrot.slane %v761, 1
      %v763 = vmax.f32 %v761, %v762
      %v764 = vsub.f32 %v731, %v742
      %v765 = vsub.f32 %v732, %v749
      %v766 = vsub.f32 %v733, %v756
      %v767 = vsub.f32 %v734, %v763
      %v768 = vmul.f32 %v764, 1.442695
      %v769 = vpow.pop %v768
      %v770 = vmul.f32 %v765, 1.442695
      %v771 = vpow.pop %v770
      %v772 = vmul.f32 %v766, 1.442695
      %v773 = vpow.pop %v772
      %v774 = vmul.f32 %v767, 1.442695
      %v775 = vpow.pop %v774
      %v776 = vsel %vm735, %v769, 0.0
      %v777 = vrot.slane %v776, 4
      %v778 = vadd.f32 %v776, %v777
      %v779 = vrot.slane %v778, 2
      %v780 = vadd.f32 %v778, %v779
      %v781 = vrot.slane %v780, 1
      %v782 = vadd.f32 %v780, %v781
      %v783 = vsel %vm735, %v771, 0.0
      %v784 = vrot.slane %v783, 4
      %v785 = vadd.f32 %v783, %v784
      %v786 = vrot.slane %v785, 2
      %v787 = vadd.f32 %v785, %v786
      %v788 = vrot.slane %v787, 1
      %v789 = vadd.f32 %v787, %v788
      %v790 = vsel %vm735, %v773, 0.0
      %v791 = vrot.slane %v790, 4
      %v792 = vadd.f32 %v790, %v791
      %v793 = vrot.slane %v792, 2
      %v794 = vadd.f32 %v792, %v793
      %v795 = vrot.slane %v794, 1
      %v796 = vadd.f32 %v794, %v795
      %v797 = vsel %vm735, %v775, 0.0
      %v798 = vrot.slane %v797, 4
      %v799 = vadd.f32 %v797, %v798
      %v800 = vrot.slane %v799, 2
      %v801 = vadd.f32 %v799, %v800
      %v802 = vrot.slane %v801, 1
      %v803 = vadd.f32 %v801, %v802
      %v804 = vlog2.pop %v782
      %v805 = vmul.f32 %v804, 0.6931472
      %v806 = vlog2.pop %v789
      %v807 = vmul.f32 %v806, 0.6931472
      %v808 = vlog2.pop %v796
      %v809 = vmul.f32 %v808, 0.6931472
      %v810 = vlog2.pop %v803
      %v811 = vmul.f32 %v810, 0.6931472
      %v812 = vadd.f32 %v805, %v742
      %v813 = vadd.f32 %v807, %v749
      %v814 = vadd.f32 %v809, %v756
      %v815 = vadd.f32 %v811, %v763
      %v816 = vshra.s32 %v295, 2
      %v817 = vshra.s32 %v296, 2
      %v818 = vand.u32 %v295, 3
      %v819 = vand.u32 %v296, 3
      %v820 = vshra.s32 %v328, 1
      %v821 = vand.u32 %v328, 1
      %v822 = vshra.s32 %v816, 1
      %v823 = vshra.s32 %v817, 1
      %vm824 = vcmp.eq.s32.totalorder %v822, %v820
      %vm825 = vcmp.eq.s32.totalorder %v823, %v820
      %v826 = vshra.s32 %v818, 1
      %v827 = vshra.s32 %v819, 1
      %vm828 = vcmp.eq.s32.totalorder %v826, %v821
      %vm829 = vcmp.eq.s32.totalorder %v827, %v821
      %vm830 = vmand %vm824, %vm828
      %vm831 = vmand %vm825, %vm829
      %v832 = vsel %vm830, 1, 0
      %v833 = vsel %vm831, 1, 0
      %v834 = vcvt.s32.f32 %v832
      %v835 = vcvt.s32.f32 %v833
      %vm840 = vcmask 1041409
      %v841 = vsel %vm840, %v813, %v812
      %vm842 = vcmask 1042434
      %v843 = vsel %vm842, %v814, %v841
      %vm844 = vcmask 1043459
      %v845 = vsel %vm844, %v815, %v843
      %vm846 = vcmask 130048
      %v847 = vsel %vm846, %v845, 0
      %849 = vmatprep.subr.mxu0 0.0
      %850 = vmatpush1.msra.mxu0 0.0
      %851 = vmatprep.subr.mxu0 0.0
      %852 = vmatpush1.msra.mxu0 0.0
      %853 = vmatprep.subr.mxu0 0.0
      %854 = vmatpush1.msra.mxu0 0.0
      %855 = vmatprep.subr.mxu0 0.0
      %856 = vmatpush1.msra.mxu0 0.0
      %857 = vmatprep.subr.mxu0 0.0
      %858 = vmatpush1.msra.mxu0 0.0
      %859 = vmatprep.subr.mxu0 0.0
      %860 = vmatpush1.msra.mxu0 0.0
      %861 = vmatprep.subr.mxu0 0.0
      %862 = vmatpush1.msra.mxu0 0.0
      %863 = vmatprep.subr.mxu0 0.0
      %864 = vmatpush1.msra.mxu0 0.0
      %865 = vmatprep.subr.mxu0 0.0
      %866 = vmatpush1.msra.mxu0 0.0
      %867 = vmatprep.subr.mxu0 0.0
      %868 = vmatpush1.msra.mxu0 0.0
      %869 = vmatprep.subr.mxu0 0.0
      %870 = vmatpush1.msra.mxu0 0.0
      %871 = vmatprep.subr.mxu0 0.0
      %872 = vmatpush1.msra.mxu0 0.0
      %873 = vmatprep.subr.mxu0 0.0
      %874 = vmatpush1.msra.mxu0 0.0
      %875 = vmatprep.subr.mxu0 0.0
      %876 = vmatpush1.msra.mxu0 0.0
      %877 = vmatprep.subr.mxu0 0.0
      %878 = vmatpush1.msra.mxu0 %v835
      %879 = vmatprep.subr.mxu0 0.0
      %880 = vmatpush1.msra.mxu0 %v834
      %881 = vmatprep.subr.mxu0 0.0
      %882 = vmatpush2.msra.mxu0 0.0
      %883 = vmatprep.subr.mxu0 0.0
      %884 = vmatpush2.msra.mxu0 0.0
      %885 = vmatprep.subr.mxu0 0.0
      %886 = vmatpush2.msra.mxu0 0.0
      %887 = vmatprep.subr.mxu0 0.0
      %888 = vmatpush2.msra.mxu0 0.0
      %889 = vmatprep.subr.mxu0 0.0
      %890 = vmatpush2.msra.mxu0 0.0
      %891 = vmatprep.subr.mxu0 0.0
      %892 = vmatpush2.msra.mxu0 0.0
      %893 = vmatprep.subr.mxu0 0.0
      %894 = vmatpush2.msra.mxu0 0.0
      %895 = vmatprep.subr.mxu0 0.0
      %896 = vmatpush2.msra.mxu0 0.0
      %897 = vmatprep.subr.mxu0 0.0
      %898 = vmatpush2.msra.mxu0 0.0
      %899 = vmatprep.subr.mxu0 0.0
      %900 = vmatpush2.msra.mxu0 0.0
      %901 = vmatprep.subr.mxu0 0.0
      %902 = vmatpush2.msra.mxu0 0.0
      %903 = vmatprep.subr.mxu0 0.0
      %904 = vmatpush2.msra.mxu0 0.0
      %905 = vmatprep.subr.mxu0 0.0
      %906 = vmatpush2.msra.mxu0 0.0
      %907 = vmatprep.subr.mxu0 0.0
      %908 = vmatpush2.msra.mxu0 0.0
      %909 = vmatprep.subr.mxu0 0.0
      %910 = vmatpush2.msra.mxu0 0.0
      %911 = vmatprep.subr.mxu0 0.0
      %912 = vmatpush2.msra.mxu0 0.0
      %913 = vmatprep.mubr.f32.mxu0 0.0
      %914 = vmatmul.mubr.f32.gmra.mxu0 %v847
      %v915 = vpop.f32.mrf.mxu0
      %v916 = vadd.f32 0.0, %v915
      %v917 = vpop.f32.mrf.mxu0
      %918 = vdwg.mxu0
      %v919 = vld [vmem:[%s4] sm:$0xf]
      %v920 = vld [vmem:[%s4 + $0x4] sm:$0xf]
      %v921 = vld [vmem:[%s4 + $0x8] sm:$0xf]
      %v922 = vld [vmem:[%s4 + $0xc] sm:$0xf]
      %v923 = vld [vmem:[%s4 + $0x10] sm:$0xf]
      %v924 = vld [vmem:[%s4 + $0x14] sm:$0xf]
      %v925 = vld [vmem:[%s4 + $0x18] sm:$0xf]
      %v926 = vld [vmem:[%s4 + $0x1c] sm:$0xf]
      %v927 = vadd.f32 %v916, %v919
      %v928 = vadd.f32 %v916, %v920
      %v929 = vadd.f32 %v916, %v921
      %v930 = vadd.f32 %v916, %v922
      %v931 = vadd.f32 %v916, %v923
      %v932 = vadd.f32 %v916, %v924
      %v933 = vadd.f32 %v916, %v925
      %v934 = vadd.f32 %v916, %v926
      %vm935 = vcmask 27648
      %v936 = vsel %vm935, %v927, -inf
      %v937 = vrot.slane %v936, 4
      %v938 = vmax.f32 %v936, %v937
      %v939 = vrot.slane %v938, 2
      %v940 = vmax.f32 %v938, %v939
      %v941 = vrot.slane %v940, 1
      %v942 = vmax.f32 %v940, %v941
      %v943 = vsel %vm935, %v928, -inf
      %v944 = vrot.slane %v943, 4
      %v945 = vmax.f32 %v943, %v944
      %v946 = vrot.slane %v945, 2
      %v947 = vmax.f32 %v945, %v946
      %v948 = vrot.slane %v947, 1
      %v949 = vmax.f32 %v947, %v948
      %v950 = vsel %vm935, %v929, -inf
      %v951 = vrot.slane %v950, 4
      %v952 = vmax.f32 %v950, %v951
      %v953 = vrot.slane %v952, 2
      %v954 = vmax.f32 %v952, %v953
      %v955 = vrot.slane %v954, 1
      %v956 = vmax.f32 %v954, %v955
      %v957 = vsel %vm935, %v930, -inf
      %v958 = vrot.slane %v957, 4
      %v959 = vmax.f32 %v957, %v958
      %v960 = vrot.slane %v959, 2
      %v961 = vmax.f32 %v959, %v960
      %v962 = vrot.slane %v961, 1
      %v963 = vmax.f32 %v961, %v962
      %v964 = vsel %vm935, %v931, -inf
      %v965 = vrot.slane %v964, 4
      %v966 = vmax.f32 %v964, %v965
      %v967 = vrot.slane %v966, 2
      %v968 = vmax.f32 %v966, %v967
      %v969 = vrot.slane %v968, 1
      %v970 = vmax.f32 %v968, %v969
      %v971 = vsel %vm935, %v932, -inf
      %v972 = vrot.slane %v971, 4
      %v973 = vmax.f32 %v971, %v972
      %v974 = vrot.slane %v973, 2
      %v975 = vmax.f32 %v973, %v974
      %v976 = vrot.slane %v975, 1
      %v977 = vmax.f32 %v975, %v976
      %v978 = vsel %vm935, %v933, -inf
      %v979 = vrot.slane %v978, 4
      %v980 = vmax.f32 %v978, %v979
      %v981 = vrot.slane %v980, 2
      %v982 = vmax.f32 %v980, %v981
      %v983 = vrot.slane %v982, 1
      %v984 = vmax.f32 %v982, %v983
      %v985 = vsel %vm935, %v934, -inf
      %v986 = vrot.slane %v985, 4
      %v987 = vmax.f32 %v985, %v986
      %v988 = vrot.slane %v987, 2
      %v989 = vmax.f32 %v987, %v988
      %v990 = vrot.slane %v989, 1
      %v991 = vmax.f32 %v989, %v990
      %v992 = vsub.f32 %v927, %v942
      %v993 = vsub.f32 %v928, %v949
      %v994 = vsub.f32 %v929, %v956
      %v995 = vsub.f32 %v930, %v963
      %v996 = vsub.f32 %v931, %v970
      %v997 = vsub.f32 %v932, %v977
      %v998 = vsub.f32 %v933, %v984
      %v999 = vsub.f32 %v934, %v991
      %v1000 = vmul.f32 %v992, 1.442695
      %v1001 = vpow.pop %v1000
      %v1002 = vmul.f32 %v993, 1.442695
      %v1003 = vpow.pop %v1002
      %v1004 = vmul.f32 %v994, 1.442695
      %v1005 = vpow.pop %v1004
      %v1006 = vmul.f32 %v995, 1.442695
      %v1007 = vpow.pop %v1006
      %v1008 = vmul.f32 %v996, 1.442695
      %v1009 = vpow.pop %v1008
      %v1010 = vmul.f32 %v997, 1.442695
      %v1011 = vpow.pop %v1010
      %v1012 = vmul.f32 %v998, 1.442695
      %v1013 = vpow.pop %v1012
      %v1014 = vmul.f32 %v999, 1.442695
      %v1015 = vpow.pop %v1014
      %v1016 = vsel %vm935, %v1001, 0.0
      %v1017 = vrot.slane %v1016, 4
      %v1018 = vadd.f32 %v1016, %v1017
      %v1019 = vrot.slane %v1018, 2
      %v1020 = vadd.f32 %v1018, %v1019
      %v1021 = vrot.slane %v1020, 1
      %v1022 = vadd.f32 %v1020, %v1021
      %v1023 = vsel %vm935, %v1003, 0.0
      %v1024 = vrot.slane %v1023, 4
      %v1025 = vadd.f32 %v1023, %v1024
      %v1026 = vrot.slane %v1025, 2
      %v1027 = vadd.f32 %v1025, %v1026
      %v1028 = vrot.slane %v1027, 1
      %v1029 = vadd.f32 %v1027, %v1028
      %v1030 = vsel %vm935, %v1005, 0.0
      %v1031 = vrot.slane %v1030, 4
      %v1032 = vadd.f32 %v1030, %v1031
      %v1033 = vrot.slane %v1032, 2
      %v1034 = vadd.f32 %v1032, %v1033
      %v1035 = vrot.slane %v1034, 1
      %v1036 = vadd.f32 %v1034, %v1035
      %v1037 = vsel %vm935, %v1007, 0.0
      %v1038 = vrot.slane %v1037, 4
      %v1039 = vadd.f32 %v1037, %v1038
      %v1040 = vrot.slane %v1039, 2
      %v1041 = vadd.f32 %v1039, %v1040
      %v1042 = vrot.slane %v1041, 1
      %v1043 = vadd.f32 %v1041, %v1042
      %v1044 = vsel %vm935, %v1009, 0.0
      %v1045 = vrot.slane %v1044, 4
      %v1046 = vadd.f32 %v1044, %v1045
      %v1047 = vrot.slane %v1046, 2
      %v1048 = vadd.f32 %v1046, %v1047
      %v1049 = vrot.slane %v1048, 1
      %v1050 = vadd.f32 %v1048, %v1049
      %v1051 = vsel %vm935, %v1011, 0.0
      %v1052 = vrot.slane %v1051, 4
      %v1053 = vadd.f32 %v1051, %v1052
      %v1054 = vrot.slane %v1053, 2
      %v1055 = vadd.f32 %v1053, %v1054
      %v1056 = vrot.slane %v1055, 1
      %v1057 = vadd.f32 %v1055, %v1056
      %v1058 = vsel %vm935, %v1013, 0.0
      %v1059 = vrot.slane %v1058, 4
      %v1060 = vadd.f32 %v1058, %v1059
      %v1061 = vrot.slane %v1060, 2
      %v1062 = vadd.f32 %v1060, %v1061
      %v1063 = vrot.slane %v1062, 1
      %v1064 = vadd.f32 %v1062, %v1063
      %v1065 = vsel %vm935, %v1015, 0.0
      %v1066 = vrot.slane %v1065, 4
      %v1067 = vadd.f32 %v1065, %v1066
      %v1068 = vrot.slane %v1067, 2
      %v1069 = vadd.f32 %v1067, %v1068
      %v1070 = vrot.slane %v1069, 1
      %v1071 = vadd.f32 %v1069, %v1070
      %v1072 = vlog2.pop %v1022
      %v1073 = vmul.f32 %v1072, 0.6931472
      %v1074 = vlog2.pop %v1029
      %v1075 = vmul.f32 %v1074, 0.6931472
      %v1076 = vlog2.pop %v1036
      %v1077 = vmul.f32 %v1076, 0.6931472
      %v1078 = vlog2.pop %v1043
      %v1079 = vmul.f32 %v1078, 0.6931472
      %v1080 = vlog2.pop %v1050
      %v1081 = vmul.f32 %v1080, 0.6931472
      %v1082 = vlog2.pop %v1057
      %v1083 = vmul.f32 %v1082, 0.6931472
      %v1084 = vlog2.pop %v1064
      %v1085 = vmul.f32 %v1084, 0.6931472
      %v1086 = vlog2.pop %v1071
      %v1087 = vmul.f32 %v1086, 0.6931472
      %v1088 = vadd.f32 %v1073, %v942
      %v1089 = vadd.f32 %v1075, %v949
      %v1090 = vadd.f32 %v1077, %v956
      %v1091 = vadd.f32 %v1079, %v963
      %v1092 = vadd.f32 %v1081, %v970
      %v1093 = vadd.f32 %v1083, %v977
      %v1094 = vadd.f32 %v1085, %v984
      %v1095 = vadd.f32 %v1087, %v991
      %v1104 = vsel %vm840, %v1089, %v1088
      %v1105 = vsel %vm842, %v1090, %v1104
      %v1106 = vsel %vm844, %v1091, %v1105
      %vm1107 = vcmask 1044484
      %v1108 = vsel %vm1107, %v1092, %v1106
      %vm1109 = vcmask 1045509
      %v1110 = vsel %vm1109, %v1093, %v1108
      %vm1111 = vcmask 1046534
      %v1112 = vsel %vm1111, %v1094, %v1110
      %vm1113 = vcmask 1047559
      %v1114 = vsel %vm1113, %v1095, %v1112
      %vm1116 = vcmask 31744
      %v1117 = vsel %vm1116, %v1114, 0.0
      %1118 = vadd.xlane.f32.xlu0 %v1117
      %v1119 = vpop.xlane.xlu0 %1118
      %v1120 = vld [vmem:[%s5] sm:$0xff]
      %v1121 = vadd.f32 %v1119, %v1120
      %vm1122 = vcmask 7168
      %v1123 = vsel %vm1122, %v1121, -inf
      %v1124 = vrot.slane %v1123, 4
      %v1125 = vmax.f32 %v1123, %v1124
      %v1126 = vrot.slane %v1125, 2
      %v1127 = vmax.f32 %v1125, %v1126
      %v1128 = vrot.slane %v1127, 1
      %v1129 = vmax.f32 %v1127, %v1128
      %v1130 = vsub.f32 %v1121, %v1129
      %v1131 = vmul.f32 %v1130, 1.442695
      %v1132 = vpow.pop %v1131
      %v1133 = vsel %vm1122, %v1132, 0.0
      %v1134 = vrot.slane %v1133, 4
      %v1135 = vadd.f32 %v1133, %v1134
      %v1136 = vrot.slane %v1135, 2
      %v1137 = vadd.f32 %v1135, %v1136
      %v1138 = vrot.slane %v1137, 1
      %v1139 = vadd.f32 %v1137, %v1138
      %v1140 = vlog2.pop %v1139
      %v1141 = vmul.f32 %v1140, 0.6931472
      %v1142 = vadd.f32 %v1141, %v1129
      %vm1143 = vcmask 0
      %1144 = vst.msk [vmem:[%s244] sm:$0x1] %vm1143, %v1142
      %p1145 = scmp.lt.s32.totalorder %s17, 1
      %s1146 = scalar_select %p1145, %s17, 1
      %s1147 = scalar_lea.vmem %s6, %s1146
      // Predicated region
      $region45: #{tpu_custom_call.1} parent=43 // pred_check
        %p1148 = pneg %p166
      $region46: #{tpu_custom_call.1} parent=43 // pred_check_branch
        %1150 = sbr.rel (%p1148) target = $region48
      $region47: #{tpu_custom_call.1} parent=43 // pred_region
        _
      $region48: #{tpu_custom_call.1} parent=43 // pred_fallthru
        _
    $region44: #{tpu_custom_call.1} parent=5 // pred_fallthru
      _
    %p1151 = scmp.le.s32.totalorder 2, %s12
    // Predicated region
    $region49: #{tpu_custom_call.1} parent=5 // pred_check
      %p1152 = pneg %p1151
    $region50: #{tpu_custom_call.1} parent=5 // pred_check_branch
      %1154 = sbr.rel (%p1152) target = $region52
    $region51: #{tpu_custom_call.1} parent=5 // pred_region
      %s1155 = ssub.s32 %s12, 2
      // Predicated region
      $region53: #{tpu_custom_call.1} parent=51 // pred_check
        %p1156 = pneg %p172
      $region54: #{tpu_custom_call.1} parent=51 // pred_check_branch
        %1158 = sbr.rel (%p1156) target = $region56
      $region55: #{tpu_custom_call.1} parent=51 // pred_region
        %p1159 = scmp.lt.s32.totalorder %s18, 1
        %s1160 = scalar_select %p1159, %s18, 1
        %s1161 = scalar_lea.vmem %s6, %s1160
      $region56: #{tpu_custom_call.1} parent=51 // pred_fallthru
        _
    $region52: #{tpu_custom_call.1} parent=5 // pred_fallthru
      _
  $region6: #{tpu_custom_call.1} parent=0 // loop_footer
    %s16 = sadd.s32 1, %s12
  $region7: #{tpu_custom_call.1} parent=0 // loop_footer_branch
    %11 = sbr.rel target = $region3
  $region8: #{tpu_custom_call.1} parent=0 // loop_exit
    _

</llo_original>
